<compile_context>
chip_gen: v5e
topology: v5e:2x2
jax: 0.10.0
libtpu: 0.0.40
codegen_flags: <defaults>
</compile_context>

<pallas_src>
import functools
import math

import jax
import jax.numpy as jnp
from jax import lax
from jax.experimental import pallas as pl
from jax.experimental.pallas import tpu as pltpu


def _round_up(x, m):
    return ((x + m - 1) // m) * m


def _choose_tb(n, cap):
    """Pick a token-block size (multiple of 8).

    Prefers a block that divides `n` exactly (no padding -> no post-kernel
    out[:N] slice, which would re-read/write the whole output in HBM) and
    that yields >= 2 grid blocks when possible.  Returns (tb, n_blocks,
    padded)."""
    cap = max(8, (cap // 8) * 8)
    if n % 8 == 0:
        uppers = []
        if n >= 16:
            uppers.append(min(cap, (n // 2 // 8) * 8))
        uppers.append(min(cap, n))
        for upper in uppers:
            for tb in range(upper, 7, -8):
                if n % tb == 0:
                    return tb, n // tb, False
    tb = min(cap, _round_up(n, 8))
    return tb, -(-n // tb), True


# ---------------------------------------------------------------------------
# Path A: HBM row gather via per-row async DMA (scales to any vocab size).
# ---------------------------------------------------------------------------
def _gather_embed_kernel(ids_smem, table_hbm, out_ref, gbuf, sem, *,
                         tb, vocab, n_blocks, scale):
    # ids_smem : (n_pad,) int32 token ids in SMEM (scalar prefetch)
    # table_hbm: (vocab, dim) embedding table left in HBM (pl.ANY)
    # out_ref  : (tb, dim) output tile (VMEM, pipelined by Pallas)
    # gbuf     : (2*tb, dim) VMEM scratch — two manually managed gather slots
    # sem      : (2,) DMA semaphores, one per slot
    #
    # NOTE: every row copy of a block targets the SAME sem slot and has the
    # identical (1, dim) shape; the single bulk wait below relies on the sum
    # of those byte counts equalling one (tb, dim) descriptor.  Do not change
    # the per-row copy shape without changing the bulk-wait descriptor.
    i = pl.program_id(0)
    slot = i % 2

    def issue_block(block_idx, to_slot):
        base = block_idx * tb
        dst_off = to_slot * tb

        def body(t, carry):
            # Out-of-range ids are clamped (PyTorch would raise); keeps the
            # DMA in bounds.  TODO(synk): no clean in-kernel error path.
            row = jnp.clip(ids_smem[base + t], 0, vocab - 1)
            pltpu.make_async_copy(
                table_hbm.at[pl.ds(row, 1), :],
                gbuf.at[pl.ds(dst_off + t, 1), :],
                sem.at[to_slot],
            ).start()
            return carry

        # Unrolled so the LLO scheduler can pack SMEM reads, clamps and DMA
        # descriptor pushes into fewer bundles (this path is issue-bound).
        lax.fori_loop(0, tb, body, 0, unroll=8)

    # Prime the manual pipeline at the first grid step.
    @pl.when(i == 0)
    def _prime():
        issue_block(0, 0)

    # Prefetch the NEXT token block into the other slot before waiting, so
    # its HBM round trip overlaps this block's epilogue + out writeback.
    @pl.when(i + 1 < n_blocks)
    def _prefetch_next():
        issue_block(i + 1, 1 - slot)

    # Single bulk wait: consumes exactly the tb row-copy completions of this
    # block's slot (descriptor bytes == tb * dim * itemsize).
    off = pl.multiple_of(slot * tb, 8)
    pltpu.make_async_copy(
        table_hbm.at[pl.ds(0, tb), :],
        gbuf.at[pl.ds(off, tb), :],
        sem.at[slot],
    ).wait()

    # sqrt(dim) fused into the copy-out; kernel is DMA bound so this is free.
    out_ref[...] = (gbuf[pl.ds(off, tb), :] * scale).astype(out_ref.dtype)


# ---------------------------------------------------------------------------
# Path B: small vocab — VMEM-resident table, one-hot @ table on the MXU.
# ---------------------------------------------------------------------------
def _onehot_embed_kernel(ids_ref, table_ref, out_ref, *, scale):
    # ids_ref  : (tb, 1) int32 ids
    # table_ref: (vocab, dim) table resident in VMEM (single copy)
    # out_ref  : (tb, dim)
    ids = ids_ref[...]
    tb = out_ref.shape[0]
    vocab = table_ref.shape[0]
    iota = lax.broadcasted_iota(jnp.int32, (tb, vocab), 1)
    # Exact 1.0 one-hot in the table dtype (bf16-safe); sqrt(dim) is applied
    # after the matmul in f32 so bf16 tables don't round the scale.
    onehot = jnp.where(ids == iota, 1.0, 0.0).astype(table_ref.dtype)
    acc = jnp.dot(onehot, table_ref[...], preferred_element_type=jnp.float32)
    out_ref[...] = (acc * scale).astype(out_ref.dtype)


# ---------------------------------------------------------------------------
# Wrapper
# ---------------------------------------------------------------------------
def embedding_forward(x, table, *, block_tokens=512, use_gather=None,
                      small_table_bytes=16 * 1024 * 1024, small_vocab=8192):
    """x: (B, S) integer ids; table: (vocab, dim). Returns table[x] * sqrt(dim)."""
    B, S = x.shape
    vocab, dim = table.shape
    N = B * S
    scale = math.sqrt(dim)
    itemsize = table.dtype.itemsize
    table_bytes = vocab * dim * itemsize

    if use_gather is None:
        # One-hot/MXU path for tables that comfortably fit VMEM (single
        # buffered) on every generation, v7x's 64 MiB physical included.
        use_gather = not (vocab <= small_vocab and table_bytes <= small_table_bytes)

    if use_gather:
        # Cap the token block so the double-buffered gather scratch plus the
        # pipelined out tiles stay well inside scoped VMEM on every gen.
        tb_budget = (12 * 1024 * 1024) // max(1, 4 * dim * itemsize)
        cap = max(8, min(block_tokens, tb_budget))
    else:
        cap = min(block_tokens, 256)   # bounds the (tb, vocab) one-hot intermediate

    tb, n_blocks, padded = _choose_tb(N, cap)
    n_pad = n_blocks * tb

    ids = x.reshape(-1).astype(jnp.int32)
    if n_pad != N:
        # Pad with id 0 so padded rows gather a valid row (sliced off below).
        ids = jnp.pad(ids, (0, n_pad - N))

    out_shape = jax.ShapeDtypeStruct((n_pad, dim), table.dtype)

    if use_gather:
        grid_spec = pltpu.PrefetchScalarGridSpec(
            num_scalar_prefetch=1,                           # ids -> SMEM
            grid=(n_blocks,),
            in_specs=[pl.BlockSpec(memory_space=pl.ANY)],    # table stays in HBM
            out_specs=pl.BlockSpec((tb, dim), lambda i, ids_ref: (i, 0)),
            scratch_shapes=[
                pltpu.VMEM((2 * tb, dim), table.dtype),      # 2 gather slots
                pltpu.SemaphoreType.DMA((2,)),               # 1 sem per slot
            ],
        )
        cost = pl.CostEstimate(
            flops=0, transcendentals=0,
            bytes_accessed=int(2 * n_pad * dim * itemsize + n_pad * 4))
        kernel = functools.partial(
            _gather_embed_kernel, tb=tb, vocab=vocab, n_blocks=n_blocks,
            scale=scale)
        out = pl.pallas_call(
            kernel, out_shape=out_shape, grid_spec=grid_spec,
            compiler_params=pltpu.CompilerParams(
                # Manual cross-step prefetch requires sequential execution.
                dimension_semantics=("arbitrary",),
                vmem_limit_bytes=32 * 1024 * 1024),
            cost_estimate=cost,
        )(ids, table)
    else:
        ids2d = ids.reshape(n_pad, 1)
        vmem_need = int(table_bytes + tb * vocab * itemsize
                        + 4 * tb * dim * max(itemsize, 4) + (4 << 20))
        vmem_limit = min(max(vmem_need, 32 << 20), 48 << 20)
        cost = pl.CostEstimate(
            flops=int(2 * n_pad * vocab * dim), transcendentals=0,
            bytes_accessed=int(table_bytes + n_pad * dim * itemsize + n_pad * 4))
        kernel = functools.partial(_onehot_embed_kernel, scale=scale)

        def _call_onehot(table_spec):
            grid_spec = pltpu.PrefetchScalarGridSpec(
                num_scalar_prefetch=0,
                grid=(n_blocks,),
                in_specs=[pl.BlockSpec((tb, 1), lambda i: (i, 0)), table_spec],
                out_specs=pl.BlockSpec((tb, dim), lambda i: (i, 0)),
            )
            return pl.pallas_call(
                kernel, out_shape=out_shape, grid_spec=grid_spec,
                compiler_params=pltpu.CompilerParams(
                    dimension_semantics=("parallel",),       # stateless blocks
                    vmem_limit_bytes=vmem_limit),
                cost_estimate=cost,
            )(ids2d, table)

        try:
            # Preferred: memory-space-only spec => whole table placed in VMEM
            # once (single buffer, no per-step double-buffering).
            out = _call_onehot(pl.BlockSpec(memory_space=pltpu.MemorySpace.VMEM))
        except Exception:
            # Fallback: blocked full-table spec (pipeline double-buffers it).
            out = _call_onehot(pl.BlockSpec((vocab, dim), lambda i: (0, 0)))

    if n_pad != N:
        out = out[:N]
    return out.reshape(B, S, dim)


if __name__ == "__main__":
    key = jax.random.PRNGKey(0)
    k1, k2, k3, k4 = jax.random.split(key, 4)

    # ---- Test 1: small vocab -> VMEM-resident table, one-hot MXU gather ----
    vocab, dim = 512, 128          # dim multiple of 128 -> lane-dense tiles
    B, S = 2, 8
    table = jax.random.normal(k1, (vocab, dim), dtype=jnp.float32)  # N(0,1) init
    x = jax.random.randint(k2, (B, S), 0, vocab, dtype=jnp.int32)

    out = jax.block_until_ready(embedding_forward(x, table))
    ref = table[x] * jnp.float32(math.sqrt(dim))
    assert out.shape == (B, S, dim) and out.dtype == jnp.float32
    assert jnp.allclose(out, ref, atol=1e-5, rtol=1e-5)

    # ---- Test 2: forced gather path; N=192 -> tb=96, 2 blocks, no pad, -----
    # ---- exercises the double-buffered prefetch + single bulk wait     -----
    vocab2, dim2 = 4096, 128
    B2, S2 = 2, 96
    table2 = jax.random.normal(k3, (vocab2, dim2), dtype=jnp.float32)
    x2 = jax.random.randint(k4, (B2, S2), 0, vocab2, dtype=jnp.int32)

    out2 = jax.block_until_ready(embedding_forward(x2, table2, use_gather=True))
    ref2 = table2[x2] * jnp.float32(math.sqrt(dim2))
    assert out2.shape == (B2, S2, dim2) and out2.dtype == jnp.float32
    assert jnp.allclose(out2, ref2, atol=1e-5, rtol=1e-5)

    # ---- Test 3: ragged N -> padding + post-slice path on the gather kernel
    x3 = x2[:, :19]                # N=38 -> tb=40, 1 block, 2 padded rows
    out3 = jax.block_until_ready(embedding_forward(x3, table2, use_gather=True))
    ref3 = table2[x3] * jnp.float32(math.sqrt(dim2))
    assert out3.shape == (2, 19, dim2)
    assert jnp.allclose(out3, ref3, atol=1e-5, rtol=1e-5)

    print("KERNEL_OK")
</pallas_src>

<mosaic_0001>
module attributes {stable_mosaic.version = 11 : i64} {
  func.func @_onehot_embed_kernel(%arg0: i32, %arg1: memref<8x1xi32, #tpu.memory_space<vmem>>, %arg2: memref<512x128xf32, #tpu.memory_space<vmem>>, %arg3: memref<8x128xf32, #tpu.memory_space<vmem>>) attributes {dimension_semantics = [#tpu.dimension_semantics<parallel>], iteration_bounds = array<i64: 2>, scalar_prefetch = 0 : i64, scratch_operands = 0 : i64, tpu.core_type = #tpu.core_type<tc>, window_params = [{transform_indices = @transform_0, window_bounds = array<i64: 8, 1>}, {pipeline_mode = #tpu.pipeline_mode<synchronous>, transform_indices = @transform_1, window_bounds = array<i64: 512, 128>}, {transform_indices = @transform_2, window_bounds = array<i64: 8, 128>}]} {
    %c0 = arith.constant 0 : index
    %c0_0 = arith.constant 0 : index
    %0 = vector.load %arg1[%c0, %c0_0] : memref<8x1xi32, #tpu.memory_space<vmem>>, vector<8x1xi32>
    %1 = tpu.iota {dimensions = array<i32: 1>} : vector<8x512xi32>
    %2 = vector.broadcast %0 : vector<8x1xi32> to vector<8x512xi32>
    %3 = arith.cmpi eq, %2, %1 : vector<8x512xi32>
    %cst = arith.constant 1.000000e+00 : f32
    %cst_1 = arith.constant 0.000000e+00 : f32
    %4 = vector.broadcast %cst : f32 to vector<8x512xf32>
    %5 = vector.broadcast %cst_1 : f32 to vector<8x512xf32>
    %6 = arith.select %3, %4, %5 : vector<8x512xi1>, vector<8x512xf32>
    %c0_2 = arith.constant 0 : index
    %c0_3 = arith.constant 0 : index
    %7 = vector.load %arg2[%c0_2, %c0_3] : memref<512x128xf32, #tpu.memory_space<vmem>>, vector<512x128xf32>
    %cst_4 = arith.constant dense<0.000000e+00> : vector<8x128xf32>
    %8 = tpu.matmul %6, %7, %cst_4 {dimension_numbers = #tpu.dot_dimension_numbers<[1], [0], [0], [1], [0, 0, 1, 1], [], []>} : vector<8x512xf32>, vector<512x128xf32>, vector<8x128xf32> -> vector<8x128xf32>
    %cst_5 = arith.constant 11.3137083 : f32
    %9 = vector.broadcast %cst_5 : f32 to vector<8x128xf32>
    %10 = arith.mulf %8, %9 : vector<8x128xf32>
    %c0_6 = arith.constant 0 : index
    %c0_7 = arith.constant 0 : index
    %11 = vector.load %arg3[%c0_6, %c0_7] : memref<8x128xf32, #tpu.memory_space<vmem>>, vector<8x128xf32>
    tpu.vector_store %arg3[%c0_6, %c0_7], %10 {strides = array<i32>} : memref<8x128xf32, #tpu.memory_space<vmem>>, vector<8x128xf32>,
    return
  }
  func.func @transform_0(%arg0: i32) -> (i32, i32) {
    %c0_i32 = arith.constant 0 : i32
    %c0_i32_0 = arith.constant 0 : i32
    return %arg0, %c0_i32 : i32, i32
  }
  func.func @transform_1(%arg0: i32) -> (i32, i32) {
    %c0_i32 = arith.constant 0 : i32
    %c0_i32_0 = arith.constant 0 : i32
    %c0_i32_1 = arith.constant 0 : i32
    return %c0_i32, %c0_i32_0 : i32, i32
  }
  func.func @transform_2(%arg0: i32) -> (i32, i32) {
    %c0_i32 = arith.constant 0 : i32
    %c0_i32_0 = arith.constant 0 : i32
    return %arg0, %c0_i32 : i32, i32
  }
}

module attributes {stable_mosaic.version = 11 : i64} {
  func.func @_onehot_embed_kernel(%arg0: i32, %arg1: memref<8x1xi32, #tpu.memory_space<vmem>>, %arg2: memref<512x128xf32, #tpu.memory_space<vmem>>, %arg3: memref<8x128xf32, #tpu.memory_space<vmem>>) attributes {dimension_semantics = [#tpu.dimension_semantics<parallel>], iteration_bounds = array<i64: 2>, scalar_prefetch = 0 : i64, scratch_operands = 0 : i64, tpu.core_type = #tpu.core_type<tc>, window_params = [{transform_indices = @transform_0, window_bounds = array<i64: 8, 1>}, {pipeline_mode = #tpu.pipeline_mode<synchronous>, transform_indices = @transform_1, window_bounds = array<i64: 512, 128>}, {transform_indices = @transform_2, window_bounds = array<i64: 8, 128>}]} {
    %c0 = arith.constant 0 : index
    %c0_0 = arith.constant 0 : index
    %0 = vector.load %arg1[%c0, %c0_0] : memref<8x1xi32, #tpu.memory_space<vmem>>, vector<8x1xi32>
    %1 = tpu.iota {dimensions = array<i32: 1>} : vector<8x512xi32>
    %2 = vector.broadcast %0 : vector<8x1xi32> to vector<8x512xi32>
    %3 = arith.cmpi eq, %2, %1 : vector<8x512xi32>
    %cst = arith.constant 1.000000e+00 : f32
    %cst_1 = arith.constant 0.000000e+00 : f32
    %4 = vector.broadcast %cst : f32 to vector<8x512xf32>
    %5 = vector.broadcast %cst_1 : f32 to vector<8x512xf32>
    %6 = arith.select %3, %4, %5 : vector<8x512xi1>, vector<8x512xf32>
    %c0_2 = arith.constant 0 : index
    %c0_3 = arith.constant 0 : index
    %7 = vector.load %arg2[%c0_2, %c0_3] : memref<512x128xf32, #tpu.memory_space<vmem>>, vector<512x128xf32>
    %cst_4 = arith.constant dense<0.000000e+00> : vector<8x128xf32>
    %8 = tpu.matmul %6, %7, %cst_4 {dimension_numbers = #tpu.dot_dimension_numbers<[1], [0], [0], [1], [0, 0, 1, 1], [], []>} : vector<8x512xf32>, vector<512x128xf32>, vector<8x128xf32> -> vector<8x128xf32>
    %cst_5 = arith.constant 11.3137083 : f32
    %9 = vector.broadcast %cst_5 : f32 to vector<8x128xf32>
    %10 = arith.mulf %8, %9 : vector<8x128xf32>
    %c0_6 = arith.constant 0 : index
    %c0_7 = arith.constant 0 : index
    %11 = vector.load %arg3[%c0_6, %c0_7] : memref<8x128xf32, #tpu.memory_space<vmem>>, vector<8x128xf32>
    tpu.vector_store %arg3[%c0_6, %c0_7], %10 {strides = array<i32>} : memref<8x128xf32, #tpu.memory_space<vmem>>, vector<8x128xf32>,
    return
  }
  func.func @transform_0(%arg0: i32) -> (i32, i32) {
    %c0_i32 = arith.constant 0 : i32
    %c0_i32_0 = arith.constant 0 : i32
    return %arg0, %c0_i32 : i32, i32
  }
  func.func @transform_1(%arg0: i32) -> (i32, i32) {
    %c0_i32 = arith.constant 0 : i32
    %c0_i32_0 = arith.constant 0 : i32
    %c0_i32_1 = arith.constant 0 : i32
    return %c0_i32, %c0_i32_0 : i32, i32
  }
  func.func @transform_2(%arg0: i32) -> (i32, i32) {
    %c0_i32 = arith.constant 0 : i32
    %c0_i32_0 = arith.constant 0 : i32
    return %arg0, %c0_i32 : i32, i32
  }
}

</mosaic_0001>

<llo_original>
// kernel: tpu_custom_call.1
$region0: #{tpu_custom_call.1}
  #allocation0 [shape = 'u32[]', space=smem, size = 0x4, offset = 0x4, fixed_abs, tag = 'smem constant byte address 0x4 - core index']
  #allocation1 [shape = 'u32[72,128]{1,0:T(1,128)}', space=vmem, size = 0x9000, scoped, tag = 'internal scratch']
  %s0 = inlined_call_operand.vmem [shape: s32[16,1], index: 0, kind: input, shape index: {}]
  %s1 = inlined_call_operand.hbm [shape: f32[512,128], index: 1, kind: input, shape index: {}]
  %s2 = inlined_call_operand.hbm [shape: f32[16,128], index: 2, kind: output, shape index: {}]
  %s3 = sld [smem:[#allocation0]]
  $region45: #{tpu_custom_call.1} parent=0
    _
  %s5 = ssub.s32 1, %s3
  %s6 = scalar_select 0, %s5, %s3
  $region1: #{tpu_custom_call.1} parent=0
    #allocation2 [shape = 'u8[262144]{0}', space=vmem, size = 0x40000, scoped, tag = 'input window, operand 1, single buffered']
    #allocation3 [shape = 's32[2]{0}', space=sflag, size = 0x8, scoped, tag = 'scoped memory for tpu_custom_call.1']
    #allocation4 [shape = 's32[2]{0}', space=sflag, size = 0x8, scoped, tag = 'scoped memory for tpu_custom_call.1']
    #allocation5 [shape = 'u8[8192]{0}', space=vmem, size = 0x2000, scoped, tag = 'output window, operand 0']
    %7 = vsyncpa [#allocation3], 0
    %8 = vsyncpa [#allocation4], 0
    %s9 = scalar_lea.sflag [#allocation4], 1
    %10 = vsyncpa %s9, 0
    loop: start=0, step=1, limit=4
    $region2: #{tpu_custom_call.1} parent=1 // loop_pre_header
      _
    $region3: #{tpu_custom_call.1} parent=1 // loop_header
      %s12 = sphi 0, %s16
      %p13 = scmp.ge.s32.totalorder %s12, 4
      %s22 = sphi 0, %s24
      %s25 = sphi 0, %s22
      %s26 = sphi 0, %s25
      %s42 = sphi 0, %s26
      %s46 = sphi 0, %s46
      %s48 = sphi 0, %s46
      %s49 = sphi 0, %s48
      %s63 = sphi 0, %s49
      %s69 = sphi 0, %s71
      %s72 = sphi 0, %s69
      %s73 = sphi 0, %s72
      %s89 = sphi 0, %s73
    $region4: #{tpu_custom_call.1} parent=1 // loop_header_branch
      %15 = sbr.rel (%p13) target = $region8
    $region5: #{tpu_custom_call.1} parent=1 // loop_body
      %s17 = ssub.s32 %s12, 1
      %s18 = ssub.s32 %s12, 2
      %s19 = sadd.s32 %s12, 1
      %s20 = ssub.s32 %s12, %s19
      %p21 = scmp.eq.s32.totalorder %s20, 0
      %s23 = sadd.s32 %s22, 1
      %s24 = scalar_select %p21, %s22, %s23
      %p27 = pneg %p21
      %p28 = scmp.eq.s32.totalorder %s12, 1
      %p29 = por %p27, %p28
      %p30 = scmp.ne.s32.totalorder %s22, %s25
      %p31 = scmp.eq.s32.totalorder %s12, 0
      %p32 = por %p30, %p31
      %p33 = scmp.ne.s32.totalorder %s22, %s25
      %p34 = scmp.eq.s32.totalorder %s17, 1
      %p35 = por %p33, %p34
      %p36 = scmp.ne.s32.totalorder %s25, %s26
      %p37 = scmp.eq.s32.totalorder %s17, 0
      %p38 = por %p36, %p37
      %p39 = scmp.ne.s32.totalorder %s25, %s26
      %p40 = scmp.eq.s32.totalorder %s18, 1
      %p41 = por %p39, %p40
      %p43 = scmp.ne.s32.totalorder %s26, %s42
      %p44 = scmp.eq.s32.totalorder %s18, 0
      %p45 = por %p43, %p44
      %s47 = sadd.s32 %s46, 1
      %p50 = scmp.eq.s32.totalorder %s12, 1
      %p51 = scmp.ne.s32.totalorder %s46, %s48
      %p52 = scmp.eq.s32.totalorder %s12, 0
      %p53 = por %p51, %p52
      %p54 = scmp.ne.s32.totalorder %s46, %s48
      %p55 = scmp.eq.s32.totalorder %s17, 1
      %p56 = por %p54, %p55
      %p57 = scmp.ne.s32.totalorder %s48, %s49
      %p58 = scmp.eq.s32.totalorder %s17, 0
      %p59 = por %p57, %p58
      %p60 = scmp.ne.s32.totalorder %s48, %s49
      %p61 = scmp.eq.s32.totalorder %s18, 1
      %p62 = por %p60, %p61
      %p64 = scmp.ne.s32.totalorder %s49, %s63
      %p65 = scmp.eq.s32.totalorder %s18, 0
      %p66 = por %p64, %p65
      %s67 = ssub.s32 %s12, %s19
      %p68 = scmp.eq.s32.totalorder %s67, 0
      %s70 = sadd.s32 %s69, 1
      %s71 = scalar_select %p68, %s69, %s70
      %p74 = pneg %p68
      %p75 = scmp.eq.s32.totalorder %s12, 1
      %p76 = por %p74, %p75
      %p77 = scmp.ne.s32.totalorder %s69, %s72
      %p78 = scmp.eq.s32.totalorder %s12, 0
      %p79 = por %p77, %p78
      %p80 = scmp.ne.s32.totalorder %s69, %s72
      %p81 = scmp.eq.s32.totalorder %s17, 1
      %p82 = por %p80, %p81
      %p83 = scmp.ne.s32.totalorder %s72, %s73
      %p84 = scmp.eq.s32.totalorder %s17, 0
      %p85 = por %p83, %p84
      %p86 = scmp.ne.s32.totalorder %s72, %s73
      %p87 = scmp.eq.s32.totalorder %s18, 1
      %p88 = por %p86, %p87
      %p90 = scmp.ne.s32.totalorder %s73, %s89
      %p91 = scmp.eq.s32.totalorder %s18, 0
      %p92 = por %p90, %p91
      %p93 = scmp.le.s32.totalorder 1, %s12
      %p94 = scmp.lt.s32.totalorder %s12, 3
      %p95 = pnand %p93, %p94
      %p96 = pneg %p95
      // Predicated region
      $region9: #{tpu_custom_call.1} parent=5 // pred_check
        _
      $region10: #{tpu_custom_call.1} parent=5 // pred_check_branch
        %98 = sbr.rel (%p95) target = $region12
      $region11: #{tpu_custom_call.1} parent=5 // pred_region
        %s99 = ssub.s32 %s12, 1
        // Predicated region
        $region13: #{tpu_custom_call.1} parent=11 // pred_check
          %p100 = pneg %p59
        $region14: #{tpu_custom_call.1} parent=11 // pred_check_branch
          %102 = sbr.rel (%p100) target = $region16
        $region15: #{tpu_custom_call.1} parent=11 // pred_region
          %104 = vsyncadd [#allocation3], 0
          %s105 = sshll.u32 %s1, 4
          %s106 = int_to_ptr.hbm [resolvable:$true] %s105
          %s107 = sshll.u32 [#allocation2], 4
          %s108 = int_to_ptr.vmem [resolvable:$true] %s107
          %113 = dma.hbm_to_vmem [thread:$0]  %s106, 8192, %s108, [#allocation3], 128, 128, 8
        $region16: #{tpu_custom_call.1} parent=11 // pred_fallthru
          _
      $region12: #{tpu_custom_call.1} parent=5 // pred_fallthru
        _
      %p114 = scmp.lt.s32.totalorder %s12, 2
      // Predicated region
      $region17: #{tpu_custom_call.1} parent=5 // pred_check
        %p115 = pneg %p114
      $region18: #{tpu_custom_call.1} parent=5 // pred_check_branch
        %117 = sbr.rel (%p115) target = $region20
      $region19: #{tpu_custom_call.1} parent=5 // pred_region
        // Predicated region
        $region21: #{tpu_custom_call.1} parent=19 // pred_check
          %p118 = pneg %p32
        $region22: #{tpu_custom_call.1} parent=19 // pred_check_branch
          %120 = sbr.rel (%p118) target = $region24
        $region23: #{tpu_custom_call.1} parent=19 // pred_region
          %p121 = scmp.lt.s32.totalorder %s12, 1
          %s122 = scalar_select %p121, %s12, 1
          %s123 = smul.addr %s122, 8
          %s124 = scalar_lea.vmem %s0, %s123
        $region24: #{tpu_custom_call.1} parent=19 // pred_fallthru
          _
      $region20: #{tpu_custom_call.1} parent=5 // pred_fallthru
        _
      %p125 = scmp.le.s32.totalorder 1, %s12
      %p126 = scmp.lt.s32.totalorder %s12, 3
      %p127 = pnand %p125, %p126
      %p128 = pneg %p127
      // Predicated region
      $region25: #{tpu_custom_call.1} parent=5 // pred_check
        _
      $region26: #{tpu_custom_call.1} parent=5 // pred_check_branch
        %130 = sbr.rel (%p127) target = $region28
      $region27: #{tpu_custom_call.1} parent=5 // pred_region
        %s131 = ssub.s32 %s12, 1
        // Predicated region
        $region29: #{tpu_custom_call.1} parent=27 // pred_check
          %p132 = pneg %p59
        $region30: #{tpu_custom_call.1} parent=27 // pred_check_branch
          %134 = sbr.rel (%p132) target = $region32
        $region31: #{tpu_custom_call.1} parent=27 // pred_region
          %136 = dma.done [#allocation3], 8192
        $region32: #{tpu_custom_call.1} parent=27 // pred_fallthru
          _
        %p137 = scmp.lt.s32.totalorder %s17, 1
        %s138 = scalar_select %p137, %s17, 1
        %s139 = smul.addr %s138, 8
        %s140 = scalar_lea.vmem %s0, %s139
        %p141 = pneg %p38
        %p142 = pneg %p35
        %p143 = pneg %p59
        %p144 = pneg %p56
        %p145 = pneg %p85
        %p146 = pneg %p82
        %s147 = sand.u32 %s72, 1
        %s148 = scalar_lea.sflag [#allocation4], %s147
        %s149 = sand.u32 %s72, 1
        %s150 = smul.addr %s149, 8
        %s151 = scalar_lea.vmem [#allocation5], %s150
        %p152 = scmp.lt.s32.totalorder %s17, 1
        %s153 = scalar_select %p152, %s17, 1
        %s154 = smul.addr %s153, 8
        %s155 = scalar_lea.vmem %s0, %s154
        %v156 = vld [vmem:[%s155] sm:$0xff]
        %v157 = vlaneseq
        %v158 = vand.u32 %v157, 127
        %v159 = vadd.s32 %v158, 128
        %v160 = vadd.s32 %v158, 256
        %v161 = vadd.s32 %v158, 384
        %162 = vset.pattern.permute.xlu0 0
        %163 = vperm.xlu0 %162, %v156
        %v164 = vpop.permute.xlu0 %163
        %vm165 = vcmp.eq.s32.totalorder %v164, %v158
        %vm166 = vcmp.eq.s32.totalorder %v164, %v159
        %vm167 = vcmp.eq.s32.totalorder %v164, %v160
        %vm168 = vcmp.eq.s32.totalorder %v164, %v161
        %v169 = vsel %vm165, 1.0, 0.0
        %v170 = vsel %vm166, 1.0, 0.0
        %v171 = vsel %vm167, 1.0, 0.0
        %v172 = vsel %vm168, 1.0, 0.0
        %v173 = vld [vmem:[#allocation2] sm:$0xff]
        %v174 = vld [vmem:[#allocation2 + $0x8] sm:$0xff]
        %v175 = vld [vmem:[#allocation2 + $0x10] sm:$0xff]
        %v176 = vld [vmem:[#allocation2 + $0x18] sm:$0xff]
        %v177 = vld [vmem:[#allocation2 + $0x20] sm:$0xff]
        %v178 = vld [vmem:[#allocation2 + $0x28] sm:$0xff]
        %v179 = vld [vmem:[#allocation2 + $0x30] sm:$0xff]
        %v180 = vld [vmem:[#allocation2 + $0x38] sm:$0xff]
        %v181 = vld [vmem:[#allocation2 + $0x40] sm:$0xff]
        %v182 = vld [vmem:[#allocation2 + $0x48] sm:$0xff]
        %v183 = vld [vmem:[#allocation2 + $0x50] sm:$0xff]
        %v184 = vld [vmem:[#allocation2 + $0x58] sm:$0xff]
        %v185 = vld [vmem:[#allocation2 + $0x60] sm:$0xff]
        %v186 = vld [vmem:[#allocation2 + $0x68] sm:$0xff]
        %v187 = vld [vmem:[#allocation2 + $0x70] sm:$0xff]
        %v188 = vld [vmem:[#allocation2 + $0x78] sm:$0xff]
        %v189 = vld [vmem:[#allocation2 + $0x80] sm:$0xff]
        %v190 = vld [vmem:[#allocation2 + $0x88] sm:$0xff]
        %v191 = vld [vmem:[#allocation2 + $0x90] sm:$0xff]
        %v192 = vld [vmem:[#allocation2 + $0x98] sm:$0xff]
        %v193 = vld [vmem:[#allocation2 + $0xa0] sm:$0xff]
        %v194 = vld [vmem:[#allocation2 + $0xa8] sm:$0xff]
        %v195 = vld [vmem:[#allocation2 + $0xb0] sm:$0xff]
        %v196 = vld [vmem:[#allocation2 + $0xb8] sm:$0xff]
        %v197 = vld [vmem:[#allocation2 + $0xc0] sm:$0xff]
        %v198 = vld [vmem:[#allocation2 + $0xc8] sm:$0xff]
        %v199 = vld [vmem:[#allocation2 + $0xd0] sm:$0xff]
        %v200 = vld [vmem:[#allocation2 + $0xd8] sm:$0xff]
        %v201 = vld [vmem:[#allocation2 + $0xe0] sm:$0xff]
        %v202 = vld [vmem:[#allocation2 + $0xe8] sm:$0xff]
        %v203 = vld [vmem:[#allocation2 + $0xf0] sm:$0xff]
        %v204 = vld [vmem:[#allocation2 + $0xf8] sm:$0xff]
        %v205 = vld [vmem:[#allocation2 + $0x100] sm:$0xff]
        %v206 = vld [vmem:[#allocation2 + $0x108] sm:$0xff]
        %v207 = vld [vmem:[#allocation2 + $0x110] sm:$0xff]
        %v208 = vld [vmem:[#allocation2 + $0x118] sm:$0xff]
        %v209 = vld [vmem:[#allocation2 + $0x120] sm:$0xff]
        %v210 = vld [vmem:[#allocation2 + $0x128] sm:$0xff]
        %v211 = vld [vmem:[#allocation2 + $0x130] sm:$0xff]
        %v212 = vld [vmem:[#allocation2 + $0x138] sm:$0xff]
        %v213 = vld [vmem:[#allocation2 + $0x140] sm:$0xff]
        %v214 = vld [vmem:[#allocation2 + $0x148] sm:$0xff]
        %v215 = vld [vmem:[#allocation2 + $0x150] sm:$0xff]
        %v216 = vld [vmem:[#allocation2 + $0x158] sm:$0xff]
        %v217 = vld [vmem:[#allocation2 + $0x160] sm:$0xff]
        %v218 = vld [vmem:[#allocation2 + $0x168] sm:$0xff]
        %v219 = vld [vmem:[#allocation2 + $0x170] sm:$0xff]
        %v220 = vld [vmem:[#allocation2 + $0x178] sm:$0xff]
        %v221 = vld [vmem:[#allocation2 + $0x180] sm:$0xff]
        %v222 = vld [vmem:[#allocation2 + $0x188] sm:$0xff]
        %v223 = vld [vmem:[#allocation2 + $0x190] sm:$0xff]
        %v224 = vld [vmem:[#allocation2 + $0x198] sm:$0xff]
        %v225 = vld [vmem:[#allocation2 + $0x1a0] sm:$0xff]
        %v226 = vld [vmem:[#allocation2 + $0x1a8] sm:$0xff]
        %v227 = vld [vmem:[#allocation2 + $0x1b0] sm:$0xff]
        %v228 = vld [vmem:[#allocation2 + $0x1b8] sm:$0xff]
        %v229 = vld [vmem:[#allocation2 + $0x1c0] sm:$0xff]
        %v230 = vld [vmem:[#allocation2 + $0x1c8] sm:$0xff]
        %v231 = vld [vmem:[#allocation2 + $0x1d0] sm:$0xff]
        %v232 = vld [vmem:[#allocation2 + $0x1d8] sm:$0xff]
        %v233 = vld [vmem:[#allocation2 + $0x1e0] sm:$0xff]
        %v234 = vld [vmem:[#allocation2 + $0x1e8] sm:$0xff]
        %v235 = vld [vmem:[#allocation2 + $0x1f0] sm:$0xff]
        %v236 = vld [vmem:[#allocation2 + $0x1f8] sm:$0xff]
        %237 = vmatpush.msra.mxu0 %v188
        %238 = vmatpush.msra.mxu0 %v187
        %239 = vmatpush.msra.mxu0 %v186
        %240 = vmatpush.msra.mxu0 %v185
        %241 = vmatpush.msra.mxu0 %v184
        %242 = vmatpush.msra.mxu0 %v183
        %243 = vmatpush.msra.mxu0 %v182
        %244 = vmatpush.msra.mxu0 %v181
        %245 = vmatpush.msra.mxu0 %v180
        %246 = vmatpush.msra.mxu0 %v179
        %247 = vmatpush.msra.mxu0 %v178
        %248 = vmatpush.msra.mxu0 %v177
        %249 = vmatpush.msra.mxu0 %v176
        %250 = vmatpush.msra.mxu0 %v175
        %251 = vmatpush.msra.mxu0 %v174
        %252 = vmatpush.msra.mxu0 %v173
        %253 = vmatmul.f32.gmra.mxu0 %v169
        %v254 = vpop.f32.mrf.mxu0
        %v255 = vadd.f32 0.0, %v254
        %256 = vdwg.mxu0
        %257 = vmatpush.msra.mxu0 %v204
        %258 = vmatpush.msra.mxu0 %v203
        %259 = vmatpush.msra.mxu0 %v202
        %260 = vmatpush.msra.mxu0 %v201
        %261 = vmatpush.msra.mxu0 %v200
        %262 = vmatpush.msra.mxu0 %v199
        %263 = vmatpush.msra.mxu0 %v198
        %264 = vmatpush.msra.mxu0 %v197
        %265 = vmatpush.msra.mxu0 %v196
        %266 = vmatpush.msra.mxu0 %v195
        %267 = vmatpush.msra.mxu0 %v194
        %268 = vmatpush.msra.mxu0 %v193
        %269 = vmatpush.msra.mxu0 %v192
        %270 = vmatpush.msra.mxu0 %v191
        %271 = vmatpush.msra.mxu0 %v190
        %272 = vmatpush.msra.mxu0 %v189
        %273 = vmatmul.f32.gmra.mxu0 %v170
        %v274 = vpop.f32.mrf.mxu0
        %v275 = vadd.f32 %v255, %v274
        %276 = vdwg.mxu0
        %277 = vmatpush.msra.mxu0 %v220
        %278 = vmatpush.msra.mxu0 %v219
        %279 = vmatpush.msra.mxu0 %v218
        %280 = vmatpush.msra.mxu0 %v217
        %281 = vmatpush.msra.mxu0 %v216
        %282 = vmatpush.msra.mxu0 %v215
        %283 = vmatpush.msra.mxu0 %v214
        %284 = vmatpush.msra.mxu0 %v213
        %285 = vmatpush.msra.mxu0 %v212
        %286 = vmatpush.msra.mxu0 %v211
        %287 = vmatpush.msra.mxu0 %v210
        %288 = vmatpush.msra.mxu0 %v209
        %289 = vmatpush.msra.mxu0 %v208
        %290 = vmatpush.msra.mxu0 %v207
        %291 = vmatpush.msra.mxu0 %v206
        %292 = vmatpush.msra.mxu0 %v205
        %293 = vmatmul.f32.gmra.mxu0 %v171
        %v294 = vpop.f32.mrf.mxu0
        %v295 = vadd.f32 %v275, %v294
        %296 = vdwg.mxu0
        %297 = vmatpush.msra.mxu0 %v236
        %298 = vmatpush.msra.mxu0 %v235
        %299 = vmatpush.msra.mxu0 %v234
        %300 = vmatpush.msra.mxu0 %v233
        %301 = vmatpush.msra.mxu0 %v232
        %302 = vmatpush.msra.mxu0 %v231
        %303 = vmatpush.msra.mxu0 %v230
        %304 = vmatpush.msra.mxu0 %v229
        %305 = vmatpush.msra.mxu0 %v228
        %306 = vmatpush.msra.mxu0 %v227
        %307 = vmatpush.msra.mxu0 %v226
        %308 = vmatpush.msra.mxu0 %v225
        %309 = vmatpush.msra.mxu0 %v224
        %310 = vmatpush.msra.mxu0 %v223
        %311 = vmatpush.msra.mxu0 %v222
        %312 = vmatpush.msra.mxu0 %v221
        %313 = vmatmul.f32.gmra.mxu0 %v172
        %v314 = vpop.f32.mrf.mxu0
        %v315 = vadd.f32 %v295, %v314
        %316 = vdwg.mxu0
        %v317 = vmul.f32 %v315, 11.313708
        %318 = vst [vmem:[%s151] sm:$0xff] %v317
        %s319 = sand.u32 %s72, 1
        %s320 = scalar_lea.sflag [#allocation4], %s319
        %s321 = sand.u32 %s72, 1
        %s322 = smul.addr %s321, 8
        %s323 = scalar_lea.vmem [#allocation5], %s322
        // Predicated region
        $region33: #{tpu_custom_call.1} parent=27 // pred_check
          %p324 = pneg %p82
        $region34: #{tpu_custom_call.1} parent=27 // pred_check_branch
          %326 = sbr.rel (%p324) target = $region36
        $region35: #{tpu_custom_call.1} parent=27 // pred_region
          %328 = vsyncadd %s320, 0
          %s329 = smul.addr %s17, 8
          %s330 = scalar_lea.hbm %s2, %s329
          %s332 = sshll.u32 %s323, 4
          %s333 = int_to_ptr.vmem [resolvable:$true] %s332
          %s334 = sshll.u32 %s330, 4
          %s335 = int_to_ptr.hbm [resolvable:$true] %s334
          %337 = dma.vmem_to_hbm [thread:$0]  %s333, 128, %s335, %s320
        $region36: #{tpu_custom_call.1} parent=27 // pred_fallthru
          _
      $region28: #{tpu_custom_call.1} parent=5 // pred_fallthru
        _
      %p338 = scmp.le.s32.totalorder 2, %s12
      // Predicated region
      $region37: #{tpu_custom_call.1} parent=5 // pred_check
        %p339 = pneg %p338
      $region38: #{tpu_custom_call.1} parent=5 // pred_check_branch
        %341 = sbr.rel (%p339) target = $region40
      $region39: #{tpu_custom_call.1} parent=5 // pred_region
        %s342 = ssub.s32 %s12, 2
        // Predicated region
        $region41: #{tpu_custom_call.1} parent=39 // pred_check
          %p343 = pneg %p88
        $region42: #{tpu_custom_call.1} parent=39 // pred_check_branch
          %345 = sbr.rel (%p343) target = $region44
        $region43: #{tpu_custom_call.1} parent=39 // pred_region
          %s346 = sand.u32 %s73, 1
          %s347 = scalar_lea.sflag [#allocation4], %s346
          %s348 = sand.u32 %s73, 1
          %s349 = smul.addr %s348, 8
          %s350 = scalar_lea.vmem [#allocation5], %s349
          %352 = dma.done %s347, 128
        $region44: #{tpu_custom_call.1} parent=39 // pred_fallthru
          _
      $region40: #{tpu_custom_call.1} parent=5 // pred_fallthru
        _
    $region6: #{tpu_custom_call.1} parent=1 // loop_footer
      %s16 = sadd.s32 1, %s12
    $region7: #{tpu_custom_call.1} parent=1 // loop_footer_branch
      %11 = sbr.rel target = $region3
    $region8: #{tpu_custom_call.1} parent=1 // loop_exit
      _
    %353 = vsyncpa [#allocation3], 1
    %s354 = scalar_lea.sflag [#allocation3], 1
    %355 = vsyncpa %s354, 1
    %356 = vsyncpa [#allocation4], 1
    %s357 = scalar_lea.sflag [#allocation4], 1
    %358 = vsyncpa %s357, 1

// kernel: tpu_custom_call.1
$region0: #{tpu_custom_call.1}
  #allocation0 [shape = 'u32[]', space=smem, size = 0x4, offset = 0x4, fixed_abs, tag = 'smem constant byte address 0x4 - core index']
  #allocation1 [shape = 'u32[72,128]{1,0:T(1,128)}', space=vmem, size = 0x9000, scoped, tag = 'internal scratch']
  %s0 = inlined_call_operand.vmem [shape: s32[16,1], index: 0, kind: input, shape index: {}]
  %s1 = inlined_call_operand.hbm [shape: f32[512,128], index: 1, kind: input, shape index: {}]
  %s2 = inlined_call_operand.hbm [shape: f32[16,128], index: 2, kind: output, shape index: {}]
  %s3 = sld [smem:[#allocation0]]
  $region45: #{tpu_custom_call.1} parent=0
    _
  %s5 = ssub.s32 1, %s3
  %s6 = scalar_select 0, %s5, %s3
  $region1: #{tpu_custom_call.1} parent=0
    #allocation2 [shape = 'u8[262144]{0}', space=vmem, size = 0x40000, scoped, tag = 'input window, operand 1, single buffered']
    #allocation3 [shape = 's32[2]{0}', space=sflag, size = 0x8, scoped, tag = 'scoped memory for tpu_custom_call.1']
    #allocation4 [shape = 's32[2]{0}', space=sflag, size = 0x8, scoped, tag = 'scoped memory for tpu_custom_call.1']
    #allocation5 [shape = 'u8[8192]{0}', space=vmem, size = 0x2000, scoped, tag = 'output window, operand 0']
    %7 = vsyncpa [#allocation3], 0
    %8 = vsyncpa [#allocation4], 0
    %s9 = scalar_lea.sflag [#allocation4], 1
    %10 = vsyncpa %s9, 0
    loop: start=0, step=1, limit=4
    $region2: #{tpu_custom_call.1} parent=1 // loop_pre_header
      _
    $region3: #{tpu_custom_call.1} parent=1 // loop_header
      %s12 = sphi 0, %s16
      %p13 = scmp.ge.s32.totalorder %s12, 4
      %s22 = sphi 0, %s24
      %s25 = sphi 0, %s22
      %s26 = sphi 0, %s25
      %s42 = sphi 0, %s26
      %s46 = sphi 0, %s46
      %s48 = sphi 0, %s46
      %s49 = sphi 0, %s48
      %s63 = sphi 0, %s49
      %s69 = sphi 0, %s71
      %s72 = sphi 0, %s69
      %s73 = sphi 0, %s72
      %s89 = sphi 0, %s73
    $region4: #{tpu_custom_call.1} parent=1 // loop_header_branch
      %15 = sbr.rel (%p13) target = $region8
    $region5: #{tpu_custom_call.1} parent=1 // loop_body
      %s17 = ssub.s32 %s12, 1
      %s18 = ssub.s32 %s12, 2
      %s19 = sadd.s32 %s12, 1
      %s20 = ssub.s32 %s12, %s19
      %p21 = scmp.eq.s32.totalorder %s20, 0
      %s23 = sadd.s32 %s22, 1
      %s24 = scalar_select %p21, %s22, %s23
      %p27 = pneg %p21
      %p28 = scmp.eq.s32.totalorder %s12, 1
      %p29 = por %p27, %p28
      %p30 = scmp.ne.s32.totalorder %s22, %s25
      %p31 = scmp.eq.s32.totalorder %s12, 0
      %p32 = por %p30, %p31
      %p33 = scmp.ne.s32.totalorder %s22, %s25
      %p34 = scmp.eq.s32.totalorder %s17, 1
      %p35 = por %p33, %p34
      %p36 = scmp.ne.s32.totalorder %s25, %s26
      %p37 = scmp.eq.s32.totalorder %s17, 0
      %p38 = por %p36, %p37
      %p39 = scmp.ne.s32.totalorder %s25, %s26
      %p40 = scmp.eq.s32.totalorder %s18, 1
      %p41 = por %p39, %p40
      %p43 = scmp.ne.s32.totalorder %s26, %s42
      %p44 = scmp.eq.s32.totalorder %s18, 0
      %p45 = por %p43, %p44
      %s47 = sadd.s32 %s46, 1
      %p50 = scmp.eq.s32.totalorder %s12, 1
      %p51 = scmp.ne.s32.totalorder %s46, %s48
      %p52 = scmp.eq.s32.totalorder %s12, 0
      %p53 = por %p51, %p52
      %p54 = scmp.ne.s32.totalorder %s46, %s48
      %p55 = scmp.eq.s32.totalorder %s17, 1
      %p56 = por %p54, %p55
      %p57 = scmp.ne.s32.totalorder %s48, %s49
      %p58 = scmp.eq.s32.totalorder %s17, 0
      %p59 = por %p57, %p58
      %p60 = scmp.ne.s32.totalorder %s48, %s49
      %p61 = scmp.eq.s32.totalorder %s18, 1
      %p62 = por %p60, %p61
      %p64 = scmp.ne.s32.totalorder %s49, %s63
      %p65 = scmp.eq.s32.totalorder %s18, 0
      %p66 = por %p64, %p65
      %s67 = ssub.s32 %s12, %s19
      %p68 = scmp.eq.s32.totalorder %s67, 0
      %s70 = sadd.s32 %s69, 1
      %s71 = scalar_select %p68, %s69, %s70
      %p74 = pneg %p68
      %p75 = scmp.eq.s32.totalorder %s12, 1
      %p76 = por %p74, %p75
      %p77 = scmp.ne.s32.totalorder %s69, %s72
      %p78 = scmp.eq.s32.totalorder %s12, 0
      %p79 = por %p77, %p78
      %p80 = scmp.ne.s32.totalorder %s69, %s72
      %p81 = scmp.eq.s32.totalorder %s17, 1
      %p82 = por %p80, %p81
      %p83 = scmp.ne.s32.totalorder %s72, %s73
      %p84 = scmp.eq.s32.totalorder %s17, 0
      %p85 = por %p83, %p84
      %p86 = scmp.ne.s32.totalorder %s72, %s73
      %p87 = scmp.eq.s32.totalorder %s18, 1
      %p88 = por %p86, %p87
      %p90 = scmp.ne.s32.totalorder %s73, %s89
      %p91 = scmp.eq.s32.totalorder %s18, 0
      %p92 = por %p90, %p91
      %p93 = scmp.le.s32.totalorder 1, %s12
      %p94 = scmp.lt.s32.totalorder %s12, 3
      %p95 = pnand %p93, %p94
      %p96 = pneg %p95
      // Predicated region
      $region9: #{tpu_custom_call.1} parent=5 // pred_check
        _
      $region10: #{tpu_custom_call.1} parent=5 // pred_check_branch
        %98 = sbr.rel (%p95) target = $region12
      $region11: #{tpu_custom_call.1} parent=5 // pred_region
        %s99 = ssub.s32 %s12, 1
        // Predicated region
        $region13: #{tpu_custom_call.1} parent=11 // pred_check
          %p100 = pneg %p59
        $region14: #{tpu_custom_call.1} parent=11 // pred_check_branch
          %102 = sbr.rel (%p100) target = $region16
        $region15: #{tpu_custom_call.1} parent=11 // pred_region
          %104 = vsyncadd [#allocation3], 0
          %s105 = sshll.u32 %s1, 4
          %s106 = int_to_ptr.hbm [resolvable:$true] %s105
          %s107 = sshll.u32 [#allocation2], 4
          %s108 = int_to_ptr.vmem [resolvable:$true] %s107
          %113 = dma.hbm_to_vmem [thread:$0]  %s106, 8192, %s108, [#allocation3], 128, 128, 8
        $region16: #{tpu_custom_call.1} parent=11 // pred_fallthru
          _
      $region12: #{tpu_custom_call.1} parent=5 // pred_fallthru
        _
      %p114 = scmp.lt.s32.totalorder %s12, 2
      // Predicated region
      $region17: #{tpu_custom_call.1} parent=5 // pred_check
        %p115 = pneg %p114
      $region18: #{tpu_custom_call.1} parent=5 // pred_check_branch
        %117 = sbr.rel (%p115) target = $region20
      $region19: #{tpu_custom_call.1} parent=5 // pred_region
        // Predicated region
        $region21: #{tpu_custom_call.1} parent=19 // pred_check
          %p118 = pneg %p32
        $region22: #{tpu_custom_call.1} parent=19 // pred_check_branch
          %120 = sbr.rel (%p118) target = $region24
        $region23: #{tpu_custom_call.1} parent=19 // pred_region
          %p121 = scmp.lt.s32.totalorder %s12, 1
          %s122 = scalar_select %p121, %s12, 1
          %s123 = smul.addr %s122, 8
          %s124 = scalar_lea.vmem %s0, %s123
        $region24: #{tpu_custom_call.1} parent=19 // pred_fallthru
          _
      $region20: #{tpu_custom_call.1} parent=5 // pred_fallthru
        _
      %p125 = scmp.le.s32.totalorder 1, %s12
      %p126 = scmp.lt.s32.totalorder %s12, 3
      %p127 = pnand %p125, %p126
      %p128 = pneg %p127
      // Predicated region
      $region25: #{tpu_custom_call.1} parent=5 // pred_check
        _
      $region26: #{tpu_custom_call.1} parent=5 // pred_check_branch
        %130 = sbr.rel (%p127) target = $region28
      $region27: #{tpu_custom_call.1} parent=5 // pred_region
        %s131 = ssub.s32 %s12, 1
        // Predicated region
        $region29: #{tpu_custom_call.1} parent=27 // pred_check
          %p132 = pneg %p59
        $region30: #{tpu_custom_call.1} parent=27 // pred_check_branch
          %134 = sbr.rel (%p132) target = $region32
        $region31: #{tpu_custom_call.1} parent=27 // pred_region
          %136 = dma.done [#allocation3], 8192
        $region32: #{tpu_custom_call.1} parent=27 // pred_fallthru
          _
        %p137 = scmp.lt.s32.totalorder %s17, 1
        %s138 = scalar_select %p137, %s17, 1
        %s139 = smul.addr %s138, 8
        %s140 = scalar_lea.vmem %s0, %s139
        %p141 = pneg %p38
        %p142 = pneg %p35
        %p143 = pneg %p59
        %p144 = pneg %p56
        %p145 = pneg %p85
        %p146 = pneg %p82
        %s147 = sand.u32 %s72, 1
        %s148 = scalar_lea.sflag [#allocation4], %s147
        %s149 = sand.u32 %s72, 1
        %s150 = smul.addr %s149, 8
        %s151 = scalar_lea.vmem [#allocation5], %s150
        %p152 = scmp.lt.s32.totalorder %s17, 1
        %s153 = scalar_select %p152, %s17, 1
        %s154 = smul.addr %s153, 8
        %s155 = scalar_lea.vmem %s0, %s154
        %v156 = vld [vmem:[%s155] sm:$0xff]
        %v157 = vlaneseq
        %v158 = vand.u32 %v157, 127
        %v159 = vadd.s32 %v158, 128
        %v160 = vadd.s32 %v158, 256
        %v161 = vadd.s32 %v158, 384
        %162 = vset.pattern.permute.xlu0 0
        %163 = vperm.xlu0 %162, %v156
        %v164 = vpop.permute.xlu0 %163
        %vm165 = vcmp.eq.s32.totalorder %v164, %v158
        %vm166 = vcmp.eq.s32.totalorder %v164, %v159
        %vm167 = vcmp.eq.s32.totalorder %v164, %v160
        %vm168 = vcmp.eq.s32.totalorder %v164, %v161
        %v169 = vsel %vm165, 1.0, 0.0
        %v170 = vsel %vm166, 1.0, 0.0
        %v171 = vsel %vm167, 1.0, 0.0
        %v172 = vsel %vm168, 1.0, 0.0
        %v173 = vld [vmem:[#allocation2] sm:$0xff]
        %v174 = vld [vmem:[#allocation2 + $0x8] sm:$0xff]
        %v175 = vld [vmem:[#allocation2 + $0x10] sm:$0xff]
        %v176 = vld [vmem:[#allocation2 + $0x18] sm:$0xff]
        %v177 = vld [vmem:[#allocation2 + $0x20] sm:$0xff]
        %v178 = vld [vmem:[#allocation2 + $0x28] sm:$0xff]
        %v179 = vld [vmem:[#allocation2 + $0x30] sm:$0xff]
        %v180 = vld [vmem:[#allocation2 + $0x38] sm:$0xff]
        %v181 = vld [vmem:[#allocation2 + $0x40] sm:$0xff]
        %v182 = vld [vmem:[#allocation2 + $0x48] sm:$0xff]
        %v183 = vld [vmem:[#allocation2 + $0x50] sm:$0xff]
        %v184 = vld [vmem:[#allocation2 + $0x58] sm:$0xff]
        %v185 = vld [vmem:[#allocation2 + $0x60] sm:$0xff]
        %v186 = vld [vmem:[#allocation2 + $0x68] sm:$0xff]
        %v187 = vld [vmem:[#allocation2 + $0x70] sm:$0xff]
        %v188 = vld [vmem:[#allocation2 + $0x78] sm:$0xff]
        %v189 = vld [vmem:[#allocation2 + $0x80] sm:$0xff]
        %v190 = vld [vmem:[#allocation2 + $0x88] sm:$0xff]
        %v191 = vld [vmem:[#allocation2 + $0x90] sm:$0xff]
        %v192 = vld [vmem:[#allocation2 + $0x98] sm:$0xff]
        %v193 = vld [vmem:[#allocation2 + $0xa0] sm:$0xff]
        %v194 = vld [vmem:[#allocation2 + $0xa8] sm:$0xff]
        %v195 = vld [vmem:[#allocation2 + $0xb0] sm:$0xff]
        %v196 = vld [vmem:[#allocation2 + $0xb8] sm:$0xff]
        %v197 = vld [vmem:[#allocation2 + $0xc0] sm:$0xff]
        %v198 = vld [vmem:[#allocation2 + $0xc8] sm:$0xff]
        %v199 = vld [vmem:[#allocation2 + $0xd0] sm:$0xff]
        %v200 = vld [vmem:[#allocation2 + $0xd8] sm:$0xff]
        %v201 = vld [vmem:[#allocation2 + $0xe0] sm:$0xff]
        %v202 = vld [vmem:[#allocation2 + $0xe8] sm:$0xff]
        %v203 = vld [vmem:[#allocation2 + $0xf0] sm:$0xff]
        %v204 = vld [vmem:[#allocation2 + $0xf8] sm:$0xff]
        %v205 = vld [vmem:[#allocation2 + $0x100] sm:$0xff]
        %v206 = vld [vmem:[#allocation2 + $0x108] sm:$0xff]
        %v207 = vld [vmem:[#allocation2 + $0x110] sm:$0xff]
        %v208 = vld [vmem:[#allocation2 + $0x118] sm:$0xff]
        %v209 = vld [vmem:[#allocation2 + $0x120] sm:$0xff]
        %v210 = vld [vmem:[#allocation2 + $0x128] sm:$0xff]
        %v211 = vld [vmem:[#allocation2 + $0x130] sm:$0xff]
        %v212 = vld [vmem:[#allocation2 + $0x138] sm:$0xff]
        %v213 = vld [vmem:[#allocation2 + $0x140] sm:$0xff]
        %v214 = vld [vmem:[#allocation2 + $0x148] sm:$0xff]
        %v215 = vld [vmem:[#allocation2 + $0x150] sm:$0xff]
        %v216 = vld [vmem:[#allocation2 + $0x158] sm:$0xff]
        %v217 = vld [vmem:[#allocation2 + $0x160] sm:$0xff]
        %v218 = vld [vmem:[#allocation2 + $0x168] sm:$0xff]
        %v219 = vld [vmem:[#allocation2 + $0x170] sm:$0xff]
        %v220 = vld [vmem:[#allocation2 + $0x178] sm:$0xff]
        %v221 = vld [vmem:[#allocation2 + $0x180] sm:$0xff]
        %v222 = vld [vmem:[#allocation2 + $0x188] sm:$0xff]
        %v223 = vld [vmem:[#allocation2 + $0x190] sm:$0xff]
        %v224 = vld [vmem:[#allocation2 + $0x198] sm:$0xff]
        %v225 = vld [vmem:[#allocation2 + $0x1a0] sm:$0xff]
        %v226 = vld [vmem:[#allocation2 + $0x1a8] sm:$0xff]
        %v227 = vld [vmem:[#allocation2 + $0x1b0] sm:$0xff]
        %v228 = vld [vmem:[#allocation2 + $0x1b8] sm:$0xff]
        %v229 = vld [vmem:[#allocation2 + $0x1c0] sm:$0xff]
        %v230 = vld [vmem:[#allocation2 + $0x1c8] sm:$0xff]
        %v231 = vld [vmem:[#allocation2 + $0x1d0] sm:$0xff]
        %v232 = vld [vmem:[#allocation2 + $0x1d8] sm:$0xff]
        %v233 = vld [vmem:[#allocation2 + $0x1e0] sm:$0xff]
        %v234 = vld [vmem:[#allocation2 + $0x1e8] sm:$0xff]
        %v235 = vld [vmem:[#allocation2 + $0x1f0] sm:$0xff]
        %v236 = vld [vmem:[#allocation2 + $0x1f8] sm:$0xff]
        %237 = vmatpush.msra.mxu0 %v188
        %238 = vmatpush.msra.mxu0 %v187
        %239 = vmatpush.msra.mxu0 %v186
        %240 = vmatpush.msra.mxu0 %v185
        %241 = vmatpush.msra.mxu0 %v184
        %242 = vmatpush.msra.mxu0 %v183
        %243 = vmatpush.msra.mxu0 %v182
        %244 = vmatpush.msra.mxu0 %v181
        %245 = vmatpush.msra.mxu0 %v180
        %246 = vmatpush.msra.mxu0 %v179
        %247 = vmatpush.msra.mxu0 %v178
        %248 = vmatpush.msra.mxu0 %v177
        %249 = vmatpush.msra.mxu0 %v176
        %250 = vmatpush.msra.mxu0 %v175
        %251 = vmatpush.msra.mxu0 %v174
        %252 = vmatpush.msra.mxu0 %v173
        %253 = vmatmul.f32.gmra.mxu0 %v169
        %v254 = vpop.f32.mrf.mxu0
        %v255 = vadd.f32 0.0, %v254
        %256 = vdwg.mxu0
        %257 = vmatpush.msra.mxu0 %v204
        %258 = vmatpush.msra.mxu0 %v203
        %259 = vmatpush.msra.mxu0 %v202
        %260 = vmatpush.msra.mxu0 %v201
        %261 = vmatpush.msra.mxu0 %v200
        %262 = vmatpush.msra.mxu0 %v199
        %263 = vmatpush.msra.mxu0 %v198
        %264 = vmatpush.msra.mxu0 %v197
        %265 = vmatpush.msra.mxu0 %v196
        %266 = vmatpush.msra.mxu0 %v195
        %267 = vmatpush.msra.mxu0 %v194
        %268 = vmatpush.msra.mxu0 %v193
        %269 = vmatpush.msra.mxu0 %v192
        %270 = vmatpush.msra.mxu0 %v191
        %271 = vmatpush.msra.mxu0 %v190
        %272 = vmatpush.msra.mxu0 %v189
        %273 = vmatmul.f32.gmra.mxu0 %v170
        %v274 = vpop.f32.mrf.mxu0
        %v275 = vadd.f32 %v255, %v274
        %276 = vdwg.mxu0
        %277 = vmatpush.msra.mxu0 %v220
        %278 = vmatpush.msra.mxu0 %v219
        %279 = vmatpush.msra.mxu0 %v218
        %280 = vmatpush.msra.mxu0 %v217
        %281 = vmatpush.msra.mxu0 %v216
        %282 = vmatpush.msra.mxu0 %v215
        %283 = vmatpush.msra.mxu0 %v214
        %284 = vmatpush.msra.mxu0 %v213
        %285 = vmatpush.msra.mxu0 %v212
        %286 = vmatpush.msra.mxu0 %v211
        %287 = vmatpush.msra.mxu0 %v210
        %288 = vmatpush.msra.mxu0 %v209
        %289 = vmatpush.msra.mxu0 %v208
        %290 = vmatpush.msra.mxu0 %v207
        %291 = vmatpush.msra.mxu0 %v206
        %292 = vmatpush.msra.mxu0 %v205
        %293 = vmatmul.f32.gmra.mxu0 %v171
        %v294 = vpop.f32.mrf.mxu0
        %v295 = vadd.f32 %v275, %v294
        %296 = vdwg.mxu0
        %297 = vmatpush.msra.mxu0 %v236
        %298 = vmatpush.msra.mxu0 %v235
        %299 = vmatpush.msra.mxu0 %v234
        %300 = vmatpush.msra.mxu0 %v233
        %301 = vmatpush.msra.mxu0 %v232
        %302 = vmatpush.msra.mxu0 %v231
        %303 = vmatpush.msra.mxu0 %v230
        %304 = vmatpush.msra.mxu0 %v229
        %305 = vmatpush.msra.mxu0 %v228
        %306 = vmatpush.msra.mxu0 %v227
        %307 = vmatpush.msra.mxu0 %v226
        %308 = vmatpush.msra.mxu0 %v225
        %309 = vmatpush.msra.mxu0 %v224
        %310 = vmatpush.msra.mxu0 %v223
        %311 = vmatpush.msra.mxu0 %v222
        %312 = vmatpush.msra.mxu0 %v221
        %313 = vmatmul.f32.gmra.mxu0 %v172
        %v314 = vpop.f32.mrf.mxu0
        %v315 = vadd.f32 %v295, %v314
        %316 = vdwg.mxu0
        %v317 = vmul.f32 %v315, 11.313708
        %318 = vst [vmem:[%s151] sm:$0xff] %v317
        %s319 = sand.u32 %s72, 1
        %s320 = scalar_lea.sflag [#allocation4], %s319
        %s321 = sand.u32 %s72, 1
        %s322 = smul.addr %s321, 8
        %s323 = scalar_lea.vmem [#allocation5], %s322
        // Predicated region
        $region33: #{tpu_custom_call.1} parent=27 // pred_check
          %p324 = pneg %p82
        $region34: #{tpu_custom_call.1} parent=27 // pred_check_branch
          %326 = sbr.rel (%p324) target = $region36
        $region35: #{tpu_custom_call.1} parent=27 // pred_region
          %328 = vsyncadd %s320, 0
          %s329 = smul.addr %s17, 8
          %s330 = scalar_lea.hbm %s2, %s329
          %s332 = sshll.u32 %s323, 4
          %s333 = int_to_ptr.vmem [resolvable:$true] %s332
          %s334 = sshll.u32 %s330, 4
          %s335 = int_to_ptr.hbm [resolvable:$true] %s334
          %337 = dma.vmem_to_hbm [thread:$0]  %s333, 128, %s335, %s320
        $region36: #{tpu_custom_call.1} parent=27 // pred_fallthru
          _
      $region28: #{tpu_custom_call.1} parent=5 // pred_fallthru
        _
      %p338 = scmp.le.s32.totalorder 2, %s12
      // Predicated region
      $region37: #{tpu_custom_call.1} parent=5 // pred_check
        %p339 = pneg %p338
      $region38: #{tpu_custom_call.1} parent=5 // pred_check_branch
        %341 = sbr.rel (%p339) target = $region40
      $region39: #{tpu_custom_call.1} parent=5 // pred_region
        %s342 = ssub.s32 %s12, 2
        // Predicated region
        $region41: #{tpu_custom_call.1} parent=39 // pred_check
          %p343 = pneg %p88
        $region42: #{tpu_custom_call.1} parent=39 // pred_check_branch
          %345 = sbr.rel (%p343) target = $region44
        $region43: #{tpu_custom_call.1} parent=39 // pred_region
          %s346 = sand.u32 %s73, 1
          %s347 = scalar_lea.sflag [#allocation4], %s346
          %s348 = sand.u32 %s73, 1
          %s349 = smul.addr %s348, 8
          %s350 = scalar_lea.vmem [#allocation5], %s349
          %352 = dma.done %s347, 128
        $region44: #{tpu_custom_call.1} parent=39 // pred_fallthru
          _
      $region40: #{tpu_custom_call.1} parent=5 // pred_fallthru
        _
    $region6: #{tpu_custom_call.1} parent=1 // loop_footer
      %s16 = sadd.s32 1, %s12
    $region7: #{tpu_custom_call.1} parent=1 // loop_footer_branch
      %11 = sbr.rel target = $region3
    $region8: #{tpu_custom_call.1} parent=1 // loop_exit
      _
    %353 = vsyncpa [#allocation3], 1
    %s354 = scalar_lea.sflag [#allocation3], 1
    %355 = vsyncpa %s354, 1
    %356 = vsyncpa [#allocation4], 1
    %s357 = scalar_lea.sflag [#allocation4], 1
    %358 = vsyncpa %s357, 1

</llo_original>
